<compile_context>
chip_gen: v6e
topology: v6e:2x2x1
jax: 0.10.0
libtpu: 0.0.40
codegen_flags: <defaults>
</compile_context>

<pallas_src>
import jax
import jax.numpy as jnp
from jax import lax
from jax.experimental import pallas as pl
from jax.experimental.pallas import tpu as pltpu


def atomic_charge_kernel(x_ref, w1_ref, b1_ref, w2_ref, b2_ref, onehot_t_ref,
                         atom_out_ref, gsum_ref):
    # Per-atom MLP: Linear(node_dim -> hidden) -> SiLU -> Linear(hidden -> 1).
    x = x_ref[...]                                                   # [T, D]
    h = jnp.dot(x, w1_ref[...],
                preferred_element_type=jnp.float32) + b1_ref[...]    # [T, H] f32
    h = h * jax.nn.sigmoid(h)                                        # SiLU
    # Second linear as [1,H] . [T,H]^T so per-atom scalars land on lanes
    # (lane-dense output stores, no width-1 MXU output column).
    atom_row = lax.dot_general(
        w2_ref[...], h, (((1,), (1,)), ((), ())),
        preferred_element_type=jnp.float32) + b2_ref[0, 0]           # [1, T]
    atom_out_ref[...] = atom_row
    # Per-tile partial per-graph sums: [1,T] . [G,T]^T -> [1,G] (one MXU op;
    # padded atom columns of the transposed one-hot are zero).
    gsum_ref[0] = lax.dot_general(
        atom_row, onehot_t_ref[...].astype(jnp.float32),
        (((1,), (1,)), ((), ())),
        preferred_element_type=jnp.float32)


def _hw_limits():
    """(tile_cap, vmem_cap) chosen per TPU generation."""
    vmem_bytes = 64 << 20                        # conservative default (v7x per-TC)
    try:
        vmem_bytes = int(pltpu.get_tpu_info().vmem_capacity_bytes)
    except Exception:                            # info unavailable -> stay safe
        pass
    if vmem_bytes <= (64 << 20):                 # v7x-class: leave headroom
        return 4096, 40 << 20
    return 8192, 64 << 20                        # v5e / v6e: 128 MiB physical


def _choose_tile(n_atoms, node_dim, num_graphs, x_bytes, tile_cap, vmem_cap):
    """Largest atom-tile (multiple of 128) whose double-buffered streamed tiles
    stay comfortably inside the per-generation VMEM budget."""
    oh_rows = -(-num_graphs // 16) * 16               # bf16 sublane padding
    per_col = 2 * (node_dim * x_bytes + oh_rows * 2 + 4)   # double-buffered
    tile = ((vmem_cap // 2) // per_col) // 128 * 128
    tile = int(max(128, min(tile, tile_cap)))
    return min(tile, -(-n_atoms // 128) * 128)


def atomic_charge(x_scalar, batch, charge, w1, b1, w2, b2, num_graphs,
                  compute_dtype=jnp.bfloat16):
    """AtomicCharge.forward:  atom_out + (tot_chrg - sum_chrg) / num_atoms."""
    n_atoms, node_dim = x_scalar.shape
    hidden_dim = w1.shape[1]
    x_bytes = jnp.dtype(compute_dtype).itemsize

    tile_cap, vmem_cap = _hw_limits()
    tile = _choose_tile(n_atoms, node_dim, num_graphs, x_bytes, tile_cap, vmem_cap)
    n_tiles = -(-n_atoms // tile)
    n_pad = n_tiles * tile

    # Stream the dominant x / w1 reads in compute_dtype (bf16 in production).
    x_in = x_scalar.astype(compute_dtype)
    w1_in = w1.astype(compute_dtype)
    if n_pad != n_atoms:
        x_in = jnp.pad(x_in, ((0, n_pad - n_atoms), (0, 0)))

    # Transposed one-hot [G, N_pad] (exact in bf16, lane-dense tiles); padded
    # atom columns are zero so they never touch the per-graph sums.
    onehot_t = (jnp.arange(num_graphs, dtype=batch.dtype)[:, None]
                == batch[None, :]).astype(jnp.bfloat16)
    if n_pad != n_atoms:
        onehot_t = jnp.pad(onehot_t, ((0, 0), (0, n_pad - n_atoms)))
    # TODO(synk): for large num_graphs, stream int32 batch ids instead and build
    # the [G, tile] mask in-kernel (one-hot HBM traffic scales as N*G*2 B).

    b1_row = b1.reshape(1, hidden_dim).astype(jnp.float32)
    w2_row = w2.reshape(1, hidden_dim).astype(jnp.float32)
    b2_smem = b2.reshape(1, 1).astype(jnp.float32)

    # Explicit VMEM budget (v5e's default scoped limit is only 16 MiB).
    oh_rows = -(-num_graphs // 16) * 16
    est = (2 * tile * node_dim * x_bytes            # x tiles (double-buffered)
           + 2 * oh_rows * tile * 2                 # one-hot tiles (bf16)
           + 2 * tile * 4                           # atom-out tiles
           + 2 * 8 * max(num_graphs, 128) * 4       # partial-sum tiles (padded)
           + (node_dim * hidden_dim * x_bytes + 4 * hidden_dim * 4))  # params
    vmem_limit = int(min(max(2 * est, 16 << 20), vmem_cap))

    atom_flat, gsum_part = pl.pallas_call(
        atomic_charge_kernel,
        out_shape=(jax.ShapeDtypeStruct((1, n_pad), jnp.float32),
                   jax.ShapeDtypeStruct((n_tiles, 1, num_graphs), jnp.float32)),
        grid=(n_tiles,),
        in_specs=[
            pl.BlockSpec((tile, node_dim), lambda t: (t, 0)),           # x
            pl.BlockSpec((node_dim, hidden_dim), lambda t: (0, 0)),     # w1
            pl.BlockSpec((1, hidden_dim), lambda t: (0, 0)),            # b1
            pl.BlockSpec((1, hidden_dim), lambda t: (0, 0)),            # w2 row
            pl.BlockSpec(memory_space=pltpu.SMEM),                      # b2 scalar
            pl.BlockSpec((num_graphs, tile), lambda t: (0, t)),         # one-hot^T
        ],
        out_specs=(
            pl.BlockSpec((1, tile), lambda t: (0, t)),                  # atom out
            pl.BlockSpec((1, 1, num_graphs), lambda t: (t, 0, 0)),      # partials
        ),
        compiler_params=pltpu.CompilerParams(
            dimension_semantics=("parallel",),
            vmem_limit_bytes=vmem_limit),
    )(x_in, w1_in, b1_row, w2_row, b2_smem, onehot_t)

    # O(N) + O(G) epilogue in plain JAX: per-graph correction, then gather.
    atom_out = atom_flat[0, :n_atoms]
    sum_chrg = gsum_part.reshape(n_tiles, num_graphs).sum(axis=0)       # [G]
    counts = jax.ops.segment_sum(jnp.ones((n_atoms,), jnp.float32), batch,
                                 num_segments=num_graphs)
    corr = (charge.astype(jnp.float32) - sum_chrg) * jnp.where(
        counts > 0, 1.0 / counts, 0.0)
    return atom_out + corr[batch]                                       # [N]


def _reference(x, batch, charge, w1, b1, w2, b2, num_graphs):
    """Plain-JAX reference of AtomicCharge.forward for verification."""
    h = x @ w1 + b1
    h = h * jax.nn.sigmoid(h)
    atom_out = (h @ w2 + b2)[:, 0]
    sum_chrg = jax.ops.segment_sum(atom_out, batch, num_segments=num_graphs)
    num_atoms = jax.ops.segment_sum(jnp.ones_like(atom_out), batch,
                                    num_segments=num_graphs)
    return atom_out + (charge[batch] - sum_chrg[batch]) / num_atoms[batch]


if __name__ == "__main__":
    node_dim, hidden_dim = 128, 64
    n_atoms, num_graphs = 16, 2

    key = jax.random.PRNGKey(0)
    k_x, k_w1, k_w2 = jax.random.split(key, 3)

    # PyTorch Linear-style uniform weights; zero / node_bias biases as in __init__.
    node_bias = 0.0
    lim1 = 1.0 / (node_dim ** 0.5)
    lim2 = 1.0 / (hidden_dim ** 0.5)
    w1 = jax.random.uniform(k_w1, (node_dim, hidden_dim), jnp.float32, -lim1, lim1)
    b1 = jnp.zeros((hidden_dim,), jnp.float32)
    w2 = jax.random.uniform(k_w2, (hidden_dim, 1), jnp.float32, -lim2, lim2)
    b2 = jnp.full((1,), node_bias, jnp.float32)

    # 16 atoms, 2 molecules (7 + 9 atoms), total charges 0 and 1.
    x_scalar = jax.random.normal(k_x, (n_atoms, node_dim), jnp.float32)
    batch = jnp.concatenate([jnp.zeros((7,), jnp.int32),
                             jnp.ones((9,), jnp.int32)])
    charge = jnp.array([0.0, 1.0], jnp.float32)

    ref = _reference(x_scalar, batch, charge, w1, b1, w2, b2, num_graphs)

    # f32 streaming path: tight check against the f32 reference.
    out_f32 = atomic_charge(x_scalar, batch, charge, w1, b1, w2, b2, num_graphs,
                            compute_dtype=jnp.float32)
    jax.block_until_ready(out_f32)
    assert out_f32.shape == (n_atoms,)
    assert jnp.allclose(out_f32, ref, atol=1e-4, rtol=1e-4)

    # bf16 streaming path (production default: halves the dominant HBM stream).
    out_bf16 = atomic_charge(x_scalar, batch, charge, w1, b1, w2, b2, num_graphs,
                             compute_dtype=jnp.bfloat16)
    jax.block_until_ready(out_bf16)
    assert out_bf16.shape == (n_atoms,)
    assert jnp.allclose(out_bf16, ref, atol=5e-2, rtol=5e-2)

    print("KERNEL_OK")
</pallas_src>

<mosaic_0001>
module attributes {stable_mosaic.version = 11 : i64} {
  func.func @atomic_charge_kernel(%arg0: i32, %arg1: memref<128x128xf32, #tpu.memory_space<vmem>>, %arg2: memref<128x64xf32, #tpu.memory_space<vmem>>, %arg3: memref<1x64xf32, #tpu.memory_space<vmem>>, %arg4: memref<1x64xf32, #tpu.memory_space<vmem>>, %arg5: memref<1x1xf32, #tpu.memory_space<smem>>, %arg6: memref<2x128xbf16, #tpu.memory_space<vmem>>, %arg7: memref<1x128xf32, #tpu.memory_space<vmem>>, %arg8: memref<1x1x2xf32, #tpu.memory_space<vmem>>) attributes {dimension_semantics = [#tpu.dimension_semantics<parallel>], iteration_bounds = array<i64: 1>, scalar_prefetch = 0 : i64, scratch_operands = 0 : i64, tpu.core_type = #tpu.core_type<tc>, window_params = [{transform_indices = @transform_0, window_bounds = array<i64: 128, 128>}, {pipeline_mode = #tpu.pipeline_mode<synchronous>, transform_indices = @transform_1, window_bounds = array<i64: 128, 64>}, {pipeline_mode = #tpu.pipeline_mode<synchronous>, transform_indices = @transform_2, window_bounds = array<i64: 1, 64>}, {pipeline_mode = #tpu.pipeline_mode<synchronous>, transform_indices = @transform_3, window_bounds = array<i64: 1, 64>}, {transform_indices = @transform_4, window_bounds = array<i64: 1, 1>}, {transform_indices = @transform_5, window_bounds = array<i64: 2, 128>}, {transform_indices = @transform_6, window_bounds = array<i64: 1, 128>}, {transform_indices = @transform_7, window_bounds = array<i64: 1, 1, 2>}]} {
    %c0 = arith.constant 0 : index
    %c0_0 = arith.constant 0 : index
    %0 = vector.load %arg1[%c0, %c0_0] : memref<128x128xf32, #tpu.memory_space<vmem>>, vector<128x128xf32>
    %c0_1 = arith.constant 0 : index
    %c0_2 = arith.constant 0 : index
    %1 = vector.load %arg2[%c0_1, %c0_2] : memref<128x64xf32, #tpu.memory_space<vmem>>, vector<128x64xf32>
    %cst = arith.constant dense<0.000000e+00> : vector<128x64xf32>
    %2 = tpu.matmul %0, %1, %cst {dimension_numbers = #tpu.dot_dimension_numbers<[1], [0], [0], [1], [0, 0, 1, 1], [], []>} : vector<128x128xf32>, vector<128x64xf32>, vector<128x64xf32> -> vector<128x64xf32>
    %c0_3 = arith.constant 0 : index
    %c0_4 = arith.constant 0 : index
    %3 = vector.load %arg3[%c0_3, %c0_4] : memref<1x64xf32, #tpu.memory_space<vmem>>, vector<1x64xf32>
    %4 = vector.broadcast %3 : vector<1x64xf32> to vector<128x64xf32>
    %5 = arith.addf %2, %4 : vector<128x64xf32>
    %6 = arith.negf %5 : vector<128x64xf32>
    %7 = math.exp %6 : vector<128x64xf32>
    %cst_5 = arith.constant 1.000000e+00 : f32
    %8 = vector.broadcast %cst_5 : f32 to vector<128x64xf32>
    %9 = arith.addf %8, %7 : vector<128x64xf32>
    %10 = arith.divf %8, %9 : vector<128x64xf32>
    %11 = arith.mulf %5, %10 : vector<128x64xf32>
    %c0_6 = arith.constant 0 : index
    %c0_7 = arith.constant 0 : index
    %12 = vector.load %arg4[%c0_6, %c0_7] : memref<1x64xf32, #tpu.memory_space<vmem>>, vector<1x64xf32>
    %cst_8 = arith.constant dense<0.000000e+00> : vector<1x128xf32>
    %13 = tpu.matmul %12, %11, %cst_8 {dimension_numbers = #tpu.dot_dimension_numbers<[1], [1], [0], [0], [0, 0, 1, 0], [], []>} : vector<1x64xf32>, vector<128x64xf32>, vector<1x128xf32> -> vector<1x128xf32>
    %c0_9 = arith.constant 0 : index
    %c0_10 = arith.constant 0 : index
    %14 = memref.load %arg5[%c0_9, %c0_10] : memref<1x1xf32, #tpu.memory_space<smem>>
    %15 = vector.broadcast %14 : f32 to vector<1x128xf32>
    %16 = arith.addf %13, %15 : vector<1x128xf32>
    %c0_11 = arith.constant 0 : index
    %c0_12 = arith.constant 0 : index
    %17 = vector.load %arg7[%c0_11, %c0_12] : memref<1x128xf32, #tpu.memory_space<vmem>>, vector<1x128xf32>
    tpu.vector_store %arg7[%c0_11, %c0_12], %16 {strides = array<i32>} : memref<1x128xf32, #tpu.memory_space<vmem>>, vector<1x128xf32>,
    %c0_13 = arith.constant 0 : index
    %c0_14 = arith.constant 0 : index
    %18 = vector.load %arg6[%c0_13, %c0_14] : memref<2x128xbf16, #tpu.memory_space<vmem>>, vector<2x128xbf16>
    %19 = arith.extf %18 : vector<2x128xbf16> to vector<2x128xf32>
    %cst_15 = arith.constant dense<0.000000e+00> : vector<1x2xf32>
    %20 = tpu.matmul %16, %19, %cst_15 {dimension_numbers = #tpu.dot_dimension_numbers<[1], [1], [0], [0], [0, 0, 1, 0], [], []>} : vector<1x128xf32>, vector<2x128xf32>, vector<1x2xf32> -> vector<1x2xf32>
    %c0_16 = arith.constant 0 : index
    %c0_17 = arith.constant 0 : index
    %c0_18 = arith.constant 0 : index
    %21 = vector.load %arg8[%c0_16, %c0_17, %c0_18] : memref<1x1x2xf32, #tpu.memory_space<vmem>>, vector<1x1x2xf32>
    %22 = vector.shape_cast %21 : vector<1x1x2xf32> to vector<1x2xf32>
    %23 = vector.shape_cast %20 : vector<1x2xf32> to vector<1x1x2xf32>
    tpu.vector_store %arg8[%c0_16, %c0_17, %c0_18], %23 {strides = array<i32>} : memref<1x1x2xf32, #tpu.memory_space<vmem>>, vector<1x1x2xf32>,
    return
  }
  func.func @transform_0(%arg0: i32) -> (i32, i32) {
    %c0_i32 = arith.constant 0 : i32
    %c0_i32_0 = arith.constant 0 : i32
    return %arg0, %c0_i32 : i32, i32
  }
  func.func @transform_1(%arg0: i32) -> (i32, i32) {
    %c0_i32 = arith.constant 0 : i32
    %c0_i32_0 = arith.constant 0 : i32
    %c0_i32_1 = arith.constant 0 : i32
    return %c0_i32, %c0_i32_0 : i32, i32
  }
  func.func @transform_2(%arg0: i32) -> (i32, i32) {
    %c0_i32 = arith.constant 0 : i32
    %c0_i32_0 = arith.constant 0 : i32
    %c0_i32_1 = arith.constant 0 : i32
    return %c0_i32, %c0_i32_0 : i32, i32
  }
  func.func @transform_3(%arg0: i32) -> (i32, i32) {
    %c0_i32 = arith.constant 0 : i32
    %c0_i32_0 = arith.constant 0 : i32
    %c0_i32_1 = arith.constant 0 : i32
    return %c0_i32, %c0_i32_0 : i32, i32
  }
  func.func @transform_4(%arg0: i32) -> (i32, i32) {
    %c0_i32 = arith.constant 0 : i32
    %c0_i32_0 = arith.constant 0 : i32
    %c0_i32_1 = arith.constant 0 : i32
    return %c0_i32, %c0_i32_0 : i32, i32
  }
  func.func @transform_5(%arg0: i32) -> (i32, i32) {
    %c0_i32 = arith.constant 0 : i32
    %c0_i32_0 = arith.constant 0 : i32
    return %c0_i32, %arg0 : i32, i32
  }
  func.func @transform_6(%arg0: i32) -> (i32, i32) {
    %c0_i32 = arith.constant 0 : i32
    %c0_i32_0 = arith.constant 0 : i32
    return %c0_i32, %arg0 : i32, i32
  }
  func.func @transform_7(%arg0: i32) -> (i32, i32, i32) {
    %c0_i32 = arith.constant 0 : i32
    %c0_i32_0 = arith.constant 0 : i32
    %c0_i32_1 = arith.constant 0 : i32
    return %arg0, %c0_i32, %c0_i32_0 : i32, i32, i32
  }
}

</mosaic_0001>

<llo_original>
// kernel: tpu_custom_call.1
$region0: #{tpu_custom_call.1}
  #allocation0 [shape = 'u32[]', space=smem, size = 0x4, offset = 0x4, fixed_abs, tag = 'smem constant byte address 0x4 - core index']
  #allocation1 [shape = 'u32[144,128]{1,0:T(1,128)}', space=vmem, size = 0x12000, scoped, tag = 'internal scratch']
  #allocation2 [shape = 'f32[1,1]{1,0:T(1,128)S(6)}', space=smem, size = 0x200, scoped, tag = 'scoped memory for tpu_custom_call.1']
  %s0 = inlined_call_operand.vmem [shape: f32[128,128], index: 0, kind: input, shape index: {}]
  %s1 = inlined_call_operand.vmem [shape: f32[128,64], index: 1, kind: input, shape index: {}]
  %s2 = inlined_call_operand.vmem [shape: f32[1,64], index: 2, kind: input, shape index: {}]
  %s3 = inlined_call_operand.vmem [shape: f32[1,64], index: 3, kind: input, shape index: {}]
  %s4 = inlined_call_operand.<no memory space> [shape: f32[1,1], index: 4, kind: input, shape index: {}]
  %s5 = inlined_call_operand.vmem [shape: bf16[2,128], index: 5, kind: input, shape index: {}]
  %s6 = inlined_call_operand.hbm [shape: f32[1,128], index: 6, kind: output, shape index: {0}]
  %s7 = inlined_call_operand.hbm [shape: f32[1,1,2], index: 7, kind: output, shape index: {1}]
  %8 = xla_tuple %s6, %s7
  %s9 = sld [smem:[#allocation0]]
  $region42: #{tpu_custom_call.1} parent=0
    _
  %s11 = ssub.s32 1, %s9
  %s12 = scalar_select 0, %s11, %s9
  %13 = sst [smem:[#allocation2]] %s4
  $region1: #{tpu_custom_call.1} parent=0
    #allocation3 [shape = 'u8[512]{0}', space=vmem, size = 0x400, scoped, tag = 'output window, operand 0, single buffered']
    #allocation4 [shape = 's32[1]{0}', space=sflag, size = 0x4, scoped, tag = 'scoped memory for tpu_custom_call.1']
    #allocation5 [shape = 'u8[512]{0}', space=vmem, size = 0x400, scoped, tag = 'output window, operand 1, single buffered']
    #allocation6 [shape = 's32[1]{0}', space=sflag, size = 0x4, scoped, tag = 'scoped memory for tpu_custom_call.1']
    %14 = vsyncpa [#allocation4], 0
    %15 = vsyncpa [#allocation6], 0
    // Predicated region
    $region2: #{tpu_custom_call.1} parent=1 // pred_check
      _
    $region3: #{tpu_custom_call.1} parent=1 // pred_check_branch
      %17 = sbr.rel (0) target = $region5
    $region4: #{tpu_custom_call.1} parent=1 // pred_region
      _
    $region5: #{tpu_custom_call.1} parent=1 // pred_fallthru
      _
    // Predicated region
    $region6: #{tpu_custom_call.1} parent=1 // pred_check
      _
    $region7: #{tpu_custom_call.1} parent=1 // pred_check_branch
      %19 = sbr.rel (0) target = $region9
    $region8: #{tpu_custom_call.1} parent=1 // pred_region
      _
    $region9: #{tpu_custom_call.1} parent=1 // pred_fallthru
      _
    // Predicated region
    $region10: #{tpu_custom_call.1} parent=1 // pred_check
      _
    $region11: #{tpu_custom_call.1} parent=1 // pred_check_branch
      %21 = sbr.rel (0) target = $region13
    $region12: #{tpu_custom_call.1} parent=1 // pred_region
      _
    $region13: #{tpu_custom_call.1} parent=1 // pred_fallthru
      _
    // Predicated region
    $region14: #{tpu_custom_call.1} parent=1 // pred_check
      _
    $region15: #{tpu_custom_call.1} parent=1 // pred_check_branch
      %23 = sbr.rel (0) target = $region17
    $region16: #{tpu_custom_call.1} parent=1 // pred_region
      _
    $region17: #{tpu_custom_call.1} parent=1 // pred_fallthru
      _
    // Predicated region
    $region18: #{tpu_custom_call.1} parent=1 // pred_check
      _
    $region19: #{tpu_custom_call.1} parent=1 // pred_check_branch
      %25 = sbr.rel (0) target = $region21
    $region20: #{tpu_custom_call.1} parent=1 // pred_region
      _
    $region21: #{tpu_custom_call.1} parent=1 // pred_fallthru
      _
    // Predicated region
    $region22: #{tpu_custom_call.1} parent=1 // pred_check
      _
    $region23: #{tpu_custom_call.1} parent=1 // pred_check_branch
      %27 = sbr.rel (0) target = $region25
    $region24: #{tpu_custom_call.1} parent=1 // pred_region
      _
    $region25: #{tpu_custom_call.1} parent=1 // pred_fallthru
      _
    %v28 = vld [vmem:[%s0] sm:$0xff]
    %v29 = vld [vmem:[%s0 + $0x8] sm:$0xff]
    %v30 = vld [vmem:[%s0 + $0x10] sm:$0xff]
    %v31 = vld [vmem:[%s0 + $0x18] sm:$0xff]
    %v32 = vld [vmem:[%s0 + $0x20] sm:$0xff]
    %v33 = vld [vmem:[%s0 + $0x28] sm:$0xff]
    %v34 = vld [vmem:[%s0 + $0x30] sm:$0xff]
    %v35 = vld [vmem:[%s0 + $0x38] sm:$0xff]
    %v36 = vld [vmem:[%s0 + $0x40] sm:$0xff]
    %v37 = vld [vmem:[%s0 + $0x48] sm:$0xff]
    %v38 = vld [vmem:[%s0 + $0x50] sm:$0xff]
    %v39 = vld [vmem:[%s0 + $0x58] sm:$0xff]
    %v40 = vld [vmem:[%s0 + $0x60] sm:$0xff]
    %v41 = vld [vmem:[%s0 + $0x68] sm:$0xff]
    %v42 = vld [vmem:[%s0 + $0x70] sm:$0xff]
    %v43 = vld [vmem:[%s0 + $0x78] sm:$0xff]
    %v44 = vld [vmem:[%s1] sm:$0xff]
    %v45 = vld [vmem:[%s1 + $0x8] sm:$0xff]
    %v46 = vld [vmem:[%s1 + $0x10] sm:$0xff]
    %v47 = vld [vmem:[%s1 + $0x18] sm:$0xff]
    %v48 = vld [vmem:[%s1 + $0x20] sm:$0xff]
    %v49 = vld [vmem:[%s1 + $0x28] sm:$0xff]
    %v50 = vld [vmem:[%s1 + $0x30] sm:$0xff]
    %v51 = vld [vmem:[%s1 + $0x38] sm:$0xff]
    %v52 = vld [vmem:[%s1 + $0x40] sm:$0xff]
    %v53 = vld [vmem:[%s1 + $0x48] sm:$0xff]
    %v54 = vld [vmem:[%s1 + $0x50] sm:$0xff]
    %v55 = vld [vmem:[%s1 + $0x58] sm:$0xff]
    %v56 = vld [vmem:[%s1 + $0x60] sm:$0xff]
    %v57 = vld [vmem:[%s1 + $0x68] sm:$0xff]
    %v58 = vld [vmem:[%s1 + $0x70] sm:$0xff]
    %v59 = vld [vmem:[%s1 + $0x78] sm:$0xff]
    %v60 = vld [vmem:[%s2] sm:$0x1]
    %v62 = vlaneseq
    %v63 = vshrl.u32 %v62, 7
    %v64 = vsub.s32 0, %v63
    %v65 = vrot.slane %v60, %v64
    %67 = vmatprep.subr.mxu0 0.0
    %68 = vmatpush1.msra.mxu0 %v59
    %69 = vmatprep.subr.mxu0 0.0
    %70 = vmatpush1.msra.mxu0 %v58
    %71 = vmatprep.subr.mxu0 0.0
    %72 = vmatpush1.msra.mxu0 %v57
    %73 = vmatprep.subr.mxu0 0.0
    %74 = vmatpush1.msra.mxu0 %v56
    %75 = vmatprep.subr.mxu0 0.0
    %76 = vmatpush1.msra.mxu0 %v55
    %77 = vmatprep.subr.mxu0 0.0
    %78 = vmatpush1.msra.mxu0 %v54
    %79 = vmatprep.subr.mxu0 0.0
    %80 = vmatpush1.msra.mxu0 %v53
    %81 = vmatprep.subr.mxu0 0.0
    %82 = vmatpush1.msra.mxu0 %v52
    %83 = vmatprep.subr.mxu0 0.0
    %84 = vmatpush1.msra.mxu0 %v51
    %85 = vmatprep.subr.mxu0 0.0
    %86 = vmatpush1.msra.mxu0 %v50
    %87 = vmatprep.subr.mxu0 0.0
    %88 = vmatpush1.msra.mxu0 %v49
    %89 = vmatprep.subr.mxu0 0.0
    %90 = vmatpush1.msra.mxu0 %v48
    %91 = vmatprep.subr.mxu0 0.0
    %92 = vmatpush1.msra.mxu0 %v47
    %93 = vmatprep.subr.mxu0 0.0
    %94 = vmatpush1.msra.mxu0 %v46
    %95 = vmatprep.subr.mxu0 0.0
    %96 = vmatpush1.msra.mxu0 %v45
    %97 = vmatprep.subr.mxu0 0.0
    %98 = vmatpush1.msra.mxu0 %v44
    %99 = vmatprep.subr.mxu0 0.0
    %100 = vmatpush2.msra.mxu0 0.0
    %101 = vmatprep.subr.mxu0 0.0
    %102 = vmatpush2.msra.mxu0 0.0
    %103 = vmatprep.subr.mxu0 0.0
    %104 = vmatpush2.msra.mxu0 0.0
    %105 = vmatprep.subr.mxu0 0.0
    %106 = vmatpush2.msra.mxu0 0.0
    %107 = vmatprep.subr.mxu0 0.0
    %108 = vmatpush2.msra.mxu0 0.0
    %109 = vmatprep.subr.mxu0 0.0
    %110 = vmatpush2.msra.mxu0 0.0
    %111 = vmatprep.subr.mxu0 0.0
    %112 = vmatpush2.msra.mxu0 0.0
    %113 = vmatprep.subr.mxu0 0.0
    %114 = vmatpush2.msra.mxu0 0.0
    %115 = vmatprep.subr.mxu0 0.0
    %116 = vmatpush2.msra.mxu0 0.0
    %117 = vmatprep.subr.mxu0 0.0
    %118 = vmatpush2.msra.mxu0 0.0
    %119 = vmatprep.subr.mxu0 0.0
    %120 = vmatpush2.msra.mxu0 0.0
    %121 = vmatprep.subr.mxu0 0.0
    %122 = vmatpush2.msra.mxu0 0.0
    %123 = vmatprep.subr.mxu0 0.0
    %124 = vmatpush2.msra.mxu0 0.0
    %125 = vmatprep.subr.mxu0 0.0
    %126 = vmatpush2.msra.mxu0 0.0
    %127 = vmatprep.subr.mxu0 0.0
    %128 = vmatpush2.msra.mxu0 0.0
    %129 = vmatprep.subr.mxu0 0.0
    %130 = vmatpush2.msra.mxu0 0.0
    %131 = vmatprep.mubr.f32.mxu0 0.0
    %132 = vmatmul.mubr.f32.gmra.mxu0 %v28
    %v133 = vpop.f32.mrf.mxu0
    %v134 = vadd.f32 %v65, %v133
    %v135 = vpop.f32.mrf.mxu0
    %136 = vmatprep.mubr.f32.mxu0 0.0
    %137 = vmatmul.mubr.f32.gmra.mxu0 %v29
    %v138 = vpop.f32.mrf.mxu0
    %v139 = vadd.f32 %v65, %v138
    %v140 = vpop.f32.mrf.mxu0
    %141 = vmatprep.mubr.f32.mxu0 0.0
    %142 = vmatmul.mubr.f32.gmra.mxu0 %v30
    %v143 = vpop.f32.mrf.mxu0
    %v144 = vadd.f32 %v65, %v143
    %v145 = vpop.f32.mrf.mxu0
    %146 = vmatprep.mubr.f32.mxu0 0.0
    %147 = vmatmul.mubr.f32.gmra.mxu0 %v31
    %v148 = vpop.f32.mrf.mxu0
    %v149 = vadd.f32 %v65, %v148
    %v150 = vpop.f32.mrf.mxu0
    %151 = vmatprep.mubr.f32.mxu0 0.0
    %152 = vmatmul.mubr.f32.gmra.mxu0 %v32
    %v153 = vpop.f32.mrf.mxu0
    %v154 = vadd.f32 %v65, %v153
    %v155 = vpop.f32.mrf.mxu0
    %156 = vmatprep.mubr.f32.mxu0 0.0
    %157 = vmatmul.mubr.f32.gmra.mxu0 %v33
    %v158 = vpop.f32.mrf.mxu0
    %v159 = vadd.f32 %v65, %v158
    %v160 = vpop.f32.mrf.mxu0
    %161 = vmatprep.mubr.f32.mxu0 0.0
    %162 = vmatmul.mubr.f32.gmra.mxu0 %v34
    %v163 = vpop.f32.mrf.mxu0
    %v164 = vadd.f32 %v65, %v163
    %v165 = vpop.f32.mrf.mxu0
    %166 = vmatprep.mubr.f32.mxu0 0.0
    %167 = vmatmul.mubr.f32.gmra.mxu0 %v35
    %v168 = vpop.f32.mrf.mxu0
    %v169 = vadd.f32 %v65, %v168
    %v170 = vpop.f32.mrf.mxu0
    %171 = vmatprep.mubr.f32.mxu0 0.0
    %172 = vmatmul.mubr.f32.gmra.mxu0 %v36
    %v173 = vpop.f32.mrf.mxu0
    %v174 = vadd.f32 %v65, %v173
    %v175 = vpop.f32.mrf.mxu0
    %176 = vmatprep.mubr.f32.mxu0 0.0
    %177 = vmatmul.mubr.f32.gmra.mxu0 %v37
    %v178 = vpop.f32.mrf.mxu0
    %v179 = vadd.f32 %v65, %v178
    %v180 = vpop.f32.mrf.mxu0
    %181 = vmatprep.mubr.f32.mxu0 0.0
    %182 = vmatmul.mubr.f32.gmra.mxu0 %v38
    %v183 = vpop.f32.mrf.mxu0
    %v184 = vadd.f32 %v65, %v183
    %v185 = vpop.f32.mrf.mxu0
    %186 = vmatprep.mubr.f32.mxu0 0.0
    %187 = vmatmul.mubr.f32.gmra.mxu0 %v39
    %v188 = vpop.f32.mrf.mxu0
    %v189 = vadd.f32 %v65, %v188
    %v190 = vpop.f32.mrf.mxu0
    %191 = vmatprep.mubr.f32.mxu0 0.0
    %192 = vmatmul.mubr.f32.gmra.mxu0 %v40
    %v193 = vpop.f32.mrf.mxu0
    %v194 = vadd.f32 %v65, %v193
    %v195 = vpop.f32.mrf.mxu0
    %196 = vmatprep.mubr.f32.mxu0 0.0
    %197 = vmatmul.mubr.f32.gmra.mxu0 %v41
    %v198 = vpop.f32.mrf.mxu0
    %v199 = vadd.f32 %v65, %v198
    %v200 = vpop.f32.mrf.mxu0
    %201 = vmatprep.mubr.f32.mxu0 0.0
    %202 = vmatmul.mubr.f32.gmra.mxu0 %v42
    %v203 = vpop.f32.mrf.mxu0
    %v204 = vadd.f32 %v65, %v203
    %v205 = vpop.f32.mrf.mxu0
    %206 = vmatprep.mubr.f32.mxu0 0.0
    %207 = vmatmul.mubr.f32.gmra.mxu0 %v43
    %v208 = vpop.f32.mrf.mxu0
    %v209 = vadd.f32 %v65, %v208
    %v210 = vpop.f32.mrf.mxu0
    %211 = vdwg.mxu0
    %v212 = vxor.u32 %v134, 2147483648
    %v213 = vxor.u32 %v139, 2147483648
    %v214 = vxor.u32 %v144, 2147483648
    %v215 = vxor.u32 %v149, 2147483648
    %v216 = vxor.u32 %v154, 2147483648
    %v217 = vxor.u32 %v159, 2147483648
    %v218 = vxor.u32 %v164, 2147483648
    %v219 = vxor.u32 %v169, 2147483648
    %v220 = vxor.u32 %v174, 2147483648
    %v221 = vxor.u32 %v179, 2147483648
    %v222 = vxor.u32 %v184, 2147483648
    %v223 = vxor.u32 %v189, 2147483648
    %v224 = vxor.u32 %v194, 2147483648
    %v225 = vxor.u32 %v199, 2147483648
    %v226 = vxor.u32 %v204, 2147483648
    %v227 = vxor.u32 %v209, 2147483648
    %v228 = vmul.f32 %v212, 1.442695
    %v229 = vpow.pop %v228
    %v230 = vmul.f32 %v213, 1.442695
    %v231 = vpow.pop %v230
    %v232 = vmul.f32 %v214, 1.442695
    %v233 = vpow.pop %v232
    %v234 = vmul.f32 %v215, 1.442695
    %v235 = vpow.pop %v234
    %v236 = vmul.f32 %v216, 1.442695
    %v237 = vpow.pop %v236
    %v238 = vmul.f32 %v217, 1.442695
    %v239 = vpow.pop %v238
    %v240 = vmul.f32 %v218, 1.442695
    %v241 = vpow.pop %v240
    %v242 = vmul.f32 %v219, 1.442695
    %v243 = vpow.pop %v242
    %v244 = vmul.f32 %v220, 1.442695
    %v245 = vpow.pop %v244
    %v246 = vmul.f32 %v221, 1.442695
    %v247 = vpow.pop %v246
    %v248 = vmul.f32 %v222, 1.442695
    %v249 = vpow.pop %v248
    %v250 = vmul.f32 %v223, 1.442695
    %v251 = vpow.pop %v250
    %v252 = vmul.f32 %v224, 1.442695
    %v253 = vpow.pop %v252
    %v254 = vmul.f32 %v225, 1.442695
    %v255 = vpow.pop %v254
    %v256 = vmul.f32 %v226, 1.442695
    %v257 = vpow.pop %v256
    %v258 = vmul.f32 %v227, 1.442695
    %v259 = vpow.pop %v258
    %v260 = vadd.f32 %v229, 1.0
    %v261 = vadd.f32 %v231, 1.0
    %v262 = vadd.f32 %v233, 1.0
    %v263 = vadd.f32 %v235, 1.0
    %v264 = vadd.f32 %v237, 1.0
    %v265 = vadd.f32 %v239, 1.0
    %v266 = vadd.f32 %v241, 1.0
    %v267 = vadd.f32 %v243, 1.0
    %v268 = vadd.f32 %v245, 1.0
    %v269 = vadd.f32 %v247, 1.0
    %v270 = vadd.f32 %v249, 1.0
    %v271 = vadd.f32 %v251, 1.0
    %v272 = vadd.f32 %v253, 1.0
    %v273 = vadd.f32 %v255, 1.0
    %v274 = vadd.f32 %v257, 1.0
    %v275 = vadd.f32 %v259, 1.0
    %v276 = vrcp.pop %v260
    %v277 = vmul.f32 1.0, %v276
    %v278 = vrcp.pop %v261
    %v279 = vmul.f32 1.0, %v278
    %v280 = vrcp.pop %v262
    %v281 = vmul.f32 1.0, %v280
    %v282 = vrcp.pop %v263
    %v283 = vmul.f32 1.0, %v282
    %v284 = vrcp.pop %v264
    %v285 = vmul.f32 1.0, %v284
    %v286 = vrcp.pop %v265
    %v287 = vmul.f32 1.0, %v286
    %v288 = vrcp.pop %v266
    %v289 = vmul.f32 1.0, %v288
    %v290 = vrcp.pop %v267
    %v291 = vmul.f32 1.0, %v290
    %v292 = vrcp.pop %v268
    %v293 = vmul.f32 1.0, %v292
    %v294 = vrcp.pop %v269
    %v295 = vmul.f32 1.0, %v294
    %v296 = vrcp.pop %v270
    %v297 = vmul.f32 1.0, %v296
    %v298 = vrcp.pop %v271
    %v299 = vmul.f32 1.0, %v298
    %v300 = vrcp.pop %v272
    %v301 = vmul.f32 1.0, %v300
    %v302 = vrcp.pop %v273
    %v303 = vmul.f32 1.0, %v302
    %v304 = vrcp.pop %v274
    %v305 = vmul.f32 1.0, %v304
    %v306 = vrcp.pop %v275
    %v307 = vmul.f32 1.0, %v306
    %v308 = vmul.f32 %v134, %v277
    %v309 = vmul.f32 %v139, %v279
    %v310 = vmul.f32 %v144, %v281
    %v311 = vmul.f32 %v149, %v283
    %v312 = vmul.f32 %v154, %v285
    %v313 = vmul.f32 %v159, %v287
    %v314 = vmul.f32 %v164, %v289
    %v315 = vmul.f32 %v169, %v291
    %v316 = vmul.f32 %v174, %v293
    %v317 = vmul.f32 %v179, %v295
    %v318 = vmul.f32 %v184, %v297
    %v319 = vmul.f32 %v189, %v299
    %v320 = vmul.f32 %v194, %v301
    %v321 = vmul.f32 %v199, %v303
    %v322 = vmul.f32 %v204, %v305
    %v323 = vmul.f32 %v209, %v307
    %v324 = vld [vmem:[%s3] sm:$0x1]
    %s325 = sld [smem:[#allocation2]]
    %v326 = vstv %s325
    %vm327 = vcmask 523264
    %v329 = vsel %vm327, %v324, 0
    %v332 = vsel %vm327, %v308, 0
    %v335 = vsel %vm327, %v309, 0
    %v338 = vsel %vm327, %v310, 0
    %v341 = vsel %vm327, %v311, 0
    %v344 = vsel %vm327, %v312, 0
    %v347 = vsel %vm327, %v313, 0
    %v350 = vsel %vm327, %v314, 0
    %v353 = vsel %vm327, %v315, 0
    %v356 = vsel %vm327, %v316, 0
    %v359 = vsel %vm327, %v317, 0
    %v362 = vsel %vm327, %v318, 0
    %v365 = vsel %vm327, %v319, 0
    %v368 = vsel %vm327, %v320, 0
    %v371 = vsel %vm327, %v321, 0
    %v374 = vsel %vm327, %v322, 0
    %v377 = vsel %vm327, %v323, 0
    %379 = vmatprep.subr.mxu0 0.0
    %380 = vmatpush1.xpose.msra.mxu0 %v377
    %381 = vmatprep.subr.mxu0 0.0
    %382 = vmatpush1.xpose.msra.mxu0 %v374
    %383 = vmatprep.subr.mxu0 0.0
    %384 = vmatpush1.xpose.msra.mxu0 %v371
    %385 = vmatprep.subr.mxu0 0.0
    %386 = vmatpush1.xpose.msra.mxu0 %v368
    %387 = vmatprep.subr.mxu0 0.0
    %388 = vmatpush1.xpose.msra.mxu0 %v365
    %389 = vmatprep.subr.mxu0 0.0
    %390 = vmatpush1.xpose.msra.mxu0 %v362
    %391 = vmatprep.subr.mxu0 0.0
    %392 = vmatpush1.xpose.msra.mxu0 %v359
    %393 = vmatprep.subr.mxu0 0.0
    %394 = vmatpush1.xpose.msra.mxu0 %v356
    %395 = vmatprep.subr.mxu0 0.0
    %396 = vmatpush1.xpose.msra.mxu0 %v353
    %397 = vmatprep.subr.mxu0 0.0
    %398 = vmatpush1.xpose.msra.mxu0 %v350
    %399 = vmatprep.subr.mxu0 0.0
    %400 = vmatpush1.xpose.msra.mxu0 %v347
    %401 = vmatprep.subr.mxu0 0.0
    %402 = vmatpush1.xpose.msra.mxu0 %v344
    %403 = vmatprep.subr.mxu0 0.0
    %404 = vmatpush1.xpose.msra.mxu0 %v341
    %405 = vmatprep.subr.mxu0 0.0
    %406 = vmatpush1.xpose.msra.mxu0 %v338
    %407 = vmatprep.subr.mxu0 0.0
    %408 = vmatpush1.xpose.msra.mxu0 %v335
    %409 = vmatprep.subr.mxu0 0.0
    %410 = vmatpush1.xpose.msra.mxu0 %v332
    %411 = vmatprep.subr.mxu0 0.0
    %412 = vmatpush2.xpose.msra.mxu0 0.0
    %413 = vmatprep.subr.mxu0 0.0
    %414 = vmatpush2.xpose.msra.mxu0 0.0
    %415 = vmatprep.subr.mxu0 0.0
    %416 = vmatpush2.xpose.msra.mxu0 0.0
    %417 = vmatprep.subr.mxu0 0.0
    %418 = vmatpush2.xpose.msra.mxu0 0.0
    %419 = vmatprep.subr.mxu0 0.0
    %420 = vmatpush2.xpose.msra.mxu0 0.0
    %421 = vmatprep.subr.mxu0 0.0
    %422 = vmatpush2.xpose.msra.mxu0 0.0
    %423 = vmatprep.subr.mxu0 0.0
    %424 = vmatpush2.xpose.msra.mxu0 0.0
    %425 = vmatprep.subr.mxu0 0.0
    %426 = vmatpush2.xpose.msra.mxu0 0.0
    %427 = vmatprep.subr.mxu0 0.0
    %428 = vmatpush2.xpose.msra.mxu0 0.0
    %429 = vmatprep.subr.mxu0 0.0
    %430 = vmatpush2.xpose.msra.mxu0 0.0
    %431 = vmatprep.subr.mxu0 0.0
    %432 = vmatpush2.xpose.msra.mxu0 0.0
    %433 = vmatprep.subr.mxu0 0.0
    %434 = vmatpush2.xpose.msra.mxu0 0.0
    %435 = vmatprep.subr.mxu0 0.0
    %436 = vmatpush2.xpose.msra.mxu0 0.0
    %437 = vmatprep.subr.mxu0 0.0
    %438 = vmatpush2.xpose.msra.mxu0 0.0
    %439 = vmatprep.subr.mxu0 0.0
    %440 = vmatpush2.xpose.msra.mxu0 0.0
    %441 = vmatprep.subr.mxu0 0.0
    %442 = vmatpush2.xpose.msra.mxu0 0.0
    %443 = vmatprep.mubr.f32.mxu0 0.0
    %444 = vmatmul.mubr.f32.gmra.mxu0 %v329
    %v445 = vpop.f32.mrf.mxu0
    %v446 = vadd.f32 %v326, %v445
    %v447 = vpop.f32.mrf.mxu0
    %448 = vdwg.mxu0
    %449 = vst [vmem:[#allocation3] sm:$0x1] %v446
    %v450 = vld [vmem:[%s5] sm:$0x1]
    %v451 = vunpack.c.l.bf16 %v450
    %452 = vmatprep.subr.mxu0 0.0
    %453 = vmatpush1.xpose.msra.mxu0 0.0
    %454 = vmatprep.subr.mxu0 0.0
    %455 = vmatpush1.xpose.msra.mxu0 0.0
    %456 = vmatprep.subr.mxu0 0.0
    %457 = vmatpush1.xpose.msra.mxu0 0.0
    %458 = vmatprep.subr.mxu0 0.0
    %459 = vmatpush1.xpose.msra.mxu0 0.0
    %460 = vmatprep.subr.mxu0 0.0
    %461 = vmatpush1.xpose.msra.mxu0 0.0
    %462 = vmatprep.subr.mxu0 0.0
    %463 = vmatpush1.xpose.msra.mxu0 0.0
    %464 = vmatprep.subr.mxu0 0.0
    %465 = vmatpush1.xpose.msra.mxu0 0.0
    %466 = vmatprep.subr.mxu0 0.0
    %467 = vmatpush1.xpose.msra.mxu0 0.0
    %468 = vmatprep.subr.mxu0 0.0
    %469 = vmatpush1.xpose.msra.mxu0 0.0
    %470 = vmatprep.subr.mxu0 0.0
    %471 = vmatpush1.xpose.msra.mxu0 0.0
    %472 = vmatprep.subr.mxu0 0.0
    %473 = vmatpush1.xpose.msra.mxu0 0.0
    %474 = vmatprep.subr.mxu0 0.0
    %475 = vmatpush1.xpose.msra.mxu0 0.0
    %476 = vmatprep.subr.mxu0 0.0
    %477 = vmatpush1.xpose.msra.mxu0 0.0
    %478 = vmatprep.subr.mxu0 0.0
    %479 = vmatpush1.xpose.msra.mxu0 0.0
    %480 = vmatprep.subr.mxu0 0.0
    %481 = vmatpush1.xpose.msra.mxu0 0.0
    %482 = vmatprep.subr.mxu0 0.0
    %483 = vmatpush1.xpose.msra.mxu0 %v451
    %484 = vmatprep.subr.mxu0 0.0
    %485 = vmatpush2.xpose.msra.mxu0 0.0
    %486 = vmatprep.subr.mxu0 0.0
    %487 = vmatpush2.xpose.msra.mxu0 0.0
    %488 = vmatprep.subr.mxu0 0.0
    %489 = vmatpush2.xpose.msra.mxu0 0.0
    %490 = vmatprep.subr.mxu0 0.0
    %491 = vmatpush2.xpose.msra.mxu0 0.0
    %492 = vmatprep.subr.mxu0 0.0
    %493 = vmatpush2.xpose.msra.mxu0 0.0
    %494 = vmatprep.subr.mxu0 0.0
    %495 = vmatpush2.xpose.msra.mxu0 0.0
    %496 = vmatprep.subr.mxu0 0.0
    %497 = vmatpush2.xpose.msra.mxu0 0.0
    %498 = vmatprep.subr.mxu0 0.0
    %499 = vmatpush2.xpose.msra.mxu0 0.0
    %500 = vmatprep.subr.mxu0 0.0
    %501 = vmatpush2.xpose.msra.mxu0 0.0
    %502 = vmatprep.subr.mxu0 0.0
    %503 = vmatpush2.xpose.msra.mxu0 0.0
    %504 = vmatprep.subr.mxu0 0.0
    %505 = vmatpush2.xpose.msra.mxu0 0.0
    %506 = vmatprep.subr.mxu0 0.0
    %507 = vmatpush2.xpose.msra.mxu0 0.0
    %508 = vmatprep.subr.mxu0 0.0
    %509 = vmatpush2.xpose.msra.mxu0 0.0
    %510 = vmatprep.subr.mxu0 0.0
    %511 = vmatpush2.xpose.msra.mxu0 0.0
    %512 = vmatprep.subr.mxu0 0.0
    %513 = vmatpush2.xpose.msra.mxu0 0.0
    %514 = vmatprep.subr.mxu0 0.0
    %515 = vmatpush2.xpose.msra.mxu0 0.0
    %516 = vmatprep.mubr.f32.mxu0 0.0
    %517 = vmatmul.mubr.f32.gmra.mxu0 %v446
    %v518 = vpop.f32.mrf.mxu0
    %v519 = vadd.f32 0.0, %v518
    %v520 = vpop.f32.mrf.mxu0
    %521 = vdwg.mxu0
    %vm522 = vcmask 8192
    %523 = vst.msk [vmem:[#allocation5] sm:$0x1] %vm522, %v519
    // Predicated region
    $region26: #{tpu_custom_call.1} parent=1 // pred_check
      _
    $region27: #{tpu_custom_call.1} parent=1 // pred_check_branch
      %525 = sbr.rel (0) target = $region29
    $region28: #{tpu_custom_call.1} parent=1 // pred_region
      %s527 = ssub.s32 16, 16
      %528 = vsyncadd [#allocation4], %s527
      %s530 = sshll.u32 [#allocation3], 4
      %s531 = int_to_ptr.vmem [resolvable:$true] %s530
      %533 = dma.vmem_to_hbm [thread:$0]  %s531, 16, %s6, [#allocation4]
    $region29: #{tpu_custom_call.1} parent=1 // pred_fallthru
      _
    // Predicated region
    $region30: #{tpu_custom_call.1} parent=1 // pred_check
      _
    $region31: #{tpu_custom_call.1} parent=1 // pred_check_branch
      %535 = sbr.rel (0) target = $region33
    $region32: #{tpu_custom_call.1} parent=1 // pred_region
      %s537 = ssub.s32 16, 16
      %538 = vsyncadd [#allocation6], %s537
      %s540 = sshll.u32 [#allocation5], 4
      %s541 = int_to_ptr.vmem [resolvable:$true] %s540
      %543 = dma.vmem_to_hbm [thread:$0]  %s541, 16, %s7, [#allocation6]
    $region33: #{tpu_custom_call.1} parent=1 // pred_fallthru
      _
    // Predicated region
    $region34: #{tpu_custom_call.1} parent=1 // pred_check
      _
    $region35: #{tpu_custom_call.1} parent=1 // pred_check_branch
      %545 = sbr.rel (0) target = $region37
    $region36: #{tpu_custom_call.1} parent=1 // pred_region
      %546 = dma.done [#allocation4], 16
    $region37: #{tpu_custom_call.1} parent=1 // pred_fallthru
      _
    // Predicated region
    $region38: #{tpu_custom_call.1} parent=1 // pred_check
      _
    $region39: #{tpu_custom_call.1} parent=1 // pred_check_branch
      %548 = sbr.rel (0) target = $region41
    $region40: #{tpu_custom_call.1} parent=1 // pred_region
      %549 = dma.done [#allocation6], 16
    $region41: #{tpu_custom_call.1} parent=1 // pred_fallthru
      _
    %550 = vsyncpa [#allocation4], 1
    %551 = vsyncpa [#allocation6], 1

</llo_original>
